<compile_context>
chip_gen: v7x
topology: tpu7x:2x2x1
jax: 0.10.0
libtpu: 0.0.40
codegen_flags: <defaults>
</compile_context>

<pallas_src>
import numpy as np
import jax
import jax.numpy as jnp
from jax import lax
from jax.experimental import pallas as pl
from jax.experimental.pallas import tpu as pltpu

# --- virtuoso feature-index constants ---------------------------------------
QPM_PRIMO_IDX = 4
TEMPO_IDX = 26
TEMPO_PRIMO_IDX = -2      # last two features

OUT_W = 8                 # output feature width (qpm 1 + tempo_primo 2 + tempo 5)
GROUP = 8                 # measures gathered + stored per iteration (sublane count)


def _tempo_selector_kernel(idx_ref, table_ref, out_ref):
    """idx_ref  : SMEM (m_pad,) int32   -- first-note index per measure
                  (row n_notes == sentinel: base cols + zero tempo feats)
       table_ref: VMEM (n_notes+1, 8) f32 -- col 0 qpm_primo, cols 1:3 tempo_primo,
                  cols 3:8 per-note tempo features (base folded into every row)
       out_ref  : VMEM (m_pad, 8) f32
    """
    m_pad = out_ref.shape[0]
    n_groups = m_pad // GROUP

    def group_body(g, carry):
        base = pl.multiple_of(g * GROUP, GROUP)
        # Gather GROUP rows from the table via dynamic sublane slices, stack into
        # one (GROUP, 8) block, and issue a single aligned store.
        rows = [table_ref[pl.ds(idx_ref[base + r], 1), :] for r in range(GROUP)]
        block = jnp.concatenate(rows, axis=0)            # (GROUP, OUT_W)
        out_ref[pl.ds(base, GROUP), :] = block
        return carry

    # m_pad is static: fully unroll short pieces, partial unroll (8) for long ones.
    unroll = True if n_groups <= 16 else 8
    lax.fori_loop(0, n_groups, group_body, 0, unroll=unroll)


def tempo_vec_meas_selector(x, measure_numbers):
    """x: (1, N, F) float32; measure_numbers: (N,) int, HOST-CONCRETE and
    non-decreasing (same contract the PyTorch module relies on for
    `measure_numbers[-1] - measure_numbers[0] + 1`).
    Returns (1, num_measures, 8) float32."""
    _, n_notes, n_feat = x.shape
    # measure_numbers must be host-concrete (not a traced array): it defines the
    # static output shape and the SMEM gather table.
    meas_np = np.asarray(measure_numbers)
    assert meas_np.ndim == 1 and meas_np.shape[0] == n_notes
    assert np.all(np.diff(meas_np) >= 0), "measure_numbers must be non-decreasing"

    first = int(meas_np[0])
    num_measures = int(meas_np[-1]) - first + 1            # static (host) shape
    m_pad = ((num_measures + GROUP - 1) // GROUP) * GROUP  # sublane / group multiple

    # ---- host-concrete gather indices: first note of each measure -----------
    targets = first + np.arange(num_measures)
    cand = np.clip(np.searchsorted(meas_np, targets), 0, n_notes - 1)
    valid = meas_np[cand] == targets                        # measure actually present?
    idx_np = np.where(valid, cand, n_notes).astype(np.int32)    # n_notes = sentinel row
    idx_np = np.concatenate(
        [idx_np, np.full((m_pad - num_measures,), n_notes, np.int32)])
    idx = jnp.asarray(idx_np)

    # ---- 8-lane table with the base row folded into every row ----------------
    x0 = x[0].astype(jnp.float32)                           # (N, F)
    qpm = x0[0, QPM_PRIMO_IDX][None]                        # (1,)
    tp = x0[0, n_feat + TEMPO_PRIMO_IDX:]                   # (2,)
    base_cols = jnp.concatenate([qpm, tp])                  # (3,)
    base_tiled = jnp.broadcast_to(base_cols[None, :], (n_notes + 1, 3))
    feat = x0[:, TEMPO_IDX:TEMPO_IDX + 5]                   # (N, 5)
    feat_ext = jnp.concatenate(
        [feat, jnp.zeros((1, 5), jnp.float32)], axis=0)     # (N+1, 5), sentinel row 0
    table = jnp.concatenate([base_tiled, feat_ext], axis=1)  # (N+1, 8)

    table_bytes = (n_notes + 1) * OUT_W * 4
    out_bytes = m_pad * OUT_W * 4
    cost = pl.CostEstimate(flops=0, transcendentals=0,
                           bytes_accessed=table_bytes + out_bytes + m_pad * 4)

    out = pl.pallas_call(
        _tempo_selector_kernel,
        out_shape=jax.ShapeDtypeStruct((m_pad, OUT_W), jnp.float32),
        grid_spec=pltpu.PrefetchScalarGridSpec(
            num_scalar_prefetch=1,             # idx -> SMEM, passed first to kernel
            grid=(1,),                         # single step: no per-tile overhead
            in_specs=[
                pl.BlockSpec((n_notes + 1, OUT_W), lambda i, idx: (0, 0)),
            ],
            out_specs=pl.BlockSpec((m_pad, OUT_W), lambda i, idx: (0, 0)),
        ),
        compiler_params=pltpu.CompilerParams(
            dimension_semantics=("arbitrary",)),   # tiny workload: one TC, one step
        cost_estimate=cost,
    )(idx, table)

    return out[:num_measures][None]                          # (1, M, 8)


def _reference(x_np, meas_np):
    """Pure-numpy reproduction of the PyTorch forward (use_mean=False)."""
    first = int(meas_np[0])
    num_m = int(meas_np[-1]) - first + 1
    qpm = x_np[0, 0, QPM_PRIMO_IDX]
    tp = x_np[0, 0, TEMPO_PRIMO_IDX:]
    feat = x_np[0, :, TEMPO_IDX:TEMPO_IDX + 5]
    out = np.zeros((1, num_m, 8), np.float32)
    out[0, :, 0] = qpm
    out[0, :, 1:3] = tp
    for m in range(num_m):
        idx = np.where(meas_np == first + m)[0]
        if len(idx) > 0:
            out[0, m, 3:8] = feat[idx[0]]
    return out


if __name__ == "__main__":
    key = jax.random.PRNGKey(0)

    N_NOTES = 64
    N_FEAT = 33  # TEMPO_IDX+5 == 31 features, plus 2 tempo_primo features at the end

    x = jax.random.normal(key, (1, N_NOTES, N_FEAT), dtype=jnp.float32)

    # Case 1: deterministic non-decreasing measure numbers: 10 measures from 3.
    notes_per_measure = [7, 6, 8, 5, 7, 6, 9, 4, 6, 6]   # sums to 64
    measure_numbers = np.repeat(np.arange(3, 3 + len(notes_per_measure)),
                                notes_per_measure).astype(np.int32)
    assert measure_numbers.shape[0] == N_NOTES

    out = jax.block_until_ready(tempo_vec_meas_selector(x, measure_numbers))
    ref = _reference(np.asarray(x), measure_numbers)
    np.testing.assert_allclose(np.asarray(out), ref, rtol=1e-5, atol=1e-5)

    # Case 2: a measure id is skipped (measure 7 absent) -> that row's beat
    # features must be zero (base cols still broadcast), matching the reference.
    measure_ids_gap = np.array([3, 4, 5, 6, 8, 9, 10, 11, 12, 13], np.int32)
    measure_numbers_gap = np.repeat(measure_ids_gap,
                                    notes_per_measure).astype(np.int32)
    assert measure_numbers_gap.shape[0] == N_NOTES

    out_gap = jax.block_until_ready(tempo_vec_meas_selector(x, measure_numbers_gap))
    ref_gap = _reference(np.asarray(x), measure_numbers_gap)
    np.testing.assert_allclose(np.asarray(out_gap), ref_gap, rtol=1e-5, atol=1e-5)

    print("KERNEL_OK")
</pallas_src>

<mosaic_0001>
module attributes {stable_mosaic.version = 11 : i64} {
  func.func @_tempo_selector_kernel(%arg0: i32, %arg1: memref<16xi32, #tpu.memory_space<smem>>, %arg2: memref<65x8xf32, #tpu.memory_space<vmem>>, %arg3: memref<16x8xf32, #tpu.memory_space<vmem>>) attributes {dimension_semantics = [#tpu.dimension_semantics<arbitrary>], iteration_bounds = array<i64: 1>, scalar_prefetch = 1 : i64, scratch_operands = 0 : i64, tpu.core_type = #tpu.core_type<tc>, window_params = [{pipeline_mode = #tpu.pipeline_mode<synchronous>, transform_indices = @transform_0, window_bounds = array<i64: 65, 8>}, {pipeline_mode = #tpu.pipeline_mode<synchronous>, transform_indices = @transform_1, window_bounds = array<i64: 16, 8>}]} {
    %c0_i32 = arith.constant 0 : i32
    %c8_i32 = arith.constant 8 : i32
    %0 = arith.muli %c0_i32, %c8_i32 : i32
    %1 = tpu.assume_multiple %0, 8 : i32
    %c0_i32_0 = arith.constant 0 : i32
    %2 = arith.addi %1, %c0_i32_0 : i32
    %3 = arith.index_cast %2 : i32 to index
    %4 = memref.load %arg1[%3] : memref<16xi32, #tpu.memory_space<smem>>
    %5 = arith.index_cast %4 : i32 to index
    %c0 = arith.constant 0 : index
    %6 = vector.load %arg2[%5, %c0] : memref<65x8xf32, #tpu.memory_space<vmem>>, vector<1x8xf32>
    %c1_i32 = arith.constant 1 : i32
    %7 = arith.addi %1, %c1_i32 : i32
    %8 = arith.index_cast %7 : i32 to index
    %9 = memref.load %arg1[%8] : memref<16xi32, #tpu.memory_space<smem>>
    %10 = arith.index_cast %9 : i32 to index
    %c0_1 = arith.constant 0 : index
    %11 = vector.load %arg2[%10, %c0_1] : memref<65x8xf32, #tpu.memory_space<vmem>>, vector<1x8xf32>
    %c2_i32 = arith.constant 2 : i32
    %12 = arith.addi %1, %c2_i32 : i32
    %13 = arith.index_cast %12 : i32 to index
    %14 = memref.load %arg1[%13] : memref<16xi32, #tpu.memory_space<smem>>
    %15 = arith.index_cast %14 : i32 to index
    %c0_2 = arith.constant 0 : index
    %16 = vector.load %arg2[%15, %c0_2] : memref<65x8xf32, #tpu.memory_space<vmem>>, vector<1x8xf32>
    %c3_i32 = arith.constant 3 : i32
    %17 = arith.addi %1, %c3_i32 : i32
    %18 = arith.index_cast %17 : i32 to index
    %19 = memref.load %arg1[%18] : memref<16xi32, #tpu.memory_space<smem>>
    %20 = arith.index_cast %19 : i32 to index
    %c0_3 = arith.constant 0 : index
    %21 = vector.load %arg2[%20, %c0_3] : memref<65x8xf32, #tpu.memory_space<vmem>>, vector<1x8xf32>
    %c4_i32 = arith.constant 4 : i32
    %22 = arith.addi %1, %c4_i32 : i32
    %23 = arith.index_cast %22 : i32 to index
    %24 = memref.load %arg1[%23] : memref<16xi32, #tpu.memory_space<smem>>
    %25 = arith.index_cast %24 : i32 to index
    %c0_4 = arith.constant 0 : index
    %26 = vector.load %arg2[%25, %c0_4] : memref<65x8xf32, #tpu.memory_space<vmem>>, vector<1x8xf32>
    %c5_i32 = arith.constant 5 : i32
    %27 = arith.addi %1, %c5_i32 : i32
    %28 = arith.index_cast %27 : i32 to index
    %29 = memref.load %arg1[%28] : memref<16xi32, #tpu.memory_space<smem>>
    %30 = arith.index_cast %29 : i32 to index
    %c0_5 = arith.constant 0 : index
    %31 = vector.load %arg2[%30, %c0_5] : memref<65x8xf32, #tpu.memory_space<vmem>>, vector<1x8xf32>
    %c6_i32 = arith.constant 6 : i32
    %32 = arith.addi %1, %c6_i32 : i32
    %33 = arith.index_cast %32 : i32 to index
    %34 = memref.load %arg1[%33] : memref<16xi32, #tpu.memory_space<smem>>
    %35 = arith.index_cast %34 : i32 to index
    %c0_6 = arith.constant 0 : index
    %36 = vector.load %arg2[%35, %c0_6] : memref<65x8xf32, #tpu.memory_space<vmem>>, vector<1x8xf32>
    %c7_i32 = arith.constant 7 : i32
    %37 = arith.addi %1, %c7_i32 : i32
    %38 = arith.index_cast %37 : i32 to index
    %39 = memref.load %arg1[%38] : memref<16xi32, #tpu.memory_space<smem>>
    %40 = arith.index_cast %39 : i32 to index
    %c0_7 = arith.constant 0 : index
    %41 = vector.load %arg2[%40, %c0_7] : memref<65x8xf32, #tpu.memory_space<vmem>>, vector<1x8xf32>
    %42 = tpu.concatenate %6, %11, %16, %21, %26, %31, %36, %41 in 0 : vector<1x8xf32>, vector<1x8xf32>, vector<1x8xf32>, vector<1x8xf32>, vector<1x8xf32>, vector<1x8xf32>, vector<1x8xf32>, vector<1x8xf32> -> vector<8x8xf32>
    %43 = arith.index_cast %1 : i32 to index
    %c0_8 = arith.constant 0 : index
    %44 = vector.load %arg3[%43, %c0_8] : memref<16x8xf32, #tpu.memory_space<vmem>>, vector<8x8xf32>
    tpu.vector_store %arg3[%43, %c0_8], %42 {strides = array<i32>} : memref<16x8xf32, #tpu.memory_space<vmem>>, vector<8x8xf32>,
    %c1_i32_9 = arith.constant 1 : i32
    %c8_i32_10 = arith.constant 8 : i32
    %45 = arith.muli %c1_i32_9, %c8_i32_10 : i32
    %46 = tpu.assume_multiple %45, 8 : i32
    %c0_i32_11 = arith.constant 0 : i32
    %47 = arith.addi %46, %c0_i32_11 : i32
    %48 = arith.index_cast %47 : i32 to index
    %49 = memref.load %arg1[%48] : memref<16xi32, #tpu.memory_space<smem>>
    %50 = arith.index_cast %49 : i32 to index
    %c0_12 = arith.constant 0 : index
    %51 = vector.load %arg2[%50, %c0_12] : memref<65x8xf32, #tpu.memory_space<vmem>>, vector<1x8xf32>
    %c1_i32_13 = arith.constant 1 : i32
    %52 = arith.addi %46, %c1_i32_13 : i32
    %53 = arith.index_cast %52 : i32 to index
    %54 = memref.load %arg1[%53] : memref<16xi32, #tpu.memory_space<smem>>
    %55 = arith.index_cast %54 : i32 to index
    %c0_14 = arith.constant 0 : index
    %56 = vector.load %arg2[%55, %c0_14] : memref<65x8xf32, #tpu.memory_space<vmem>>, vector<1x8xf32>
    %c2_i32_15 = arith.constant 2 : i32
    %57 = arith.addi %46, %c2_i32_15 : i32
    %58 = arith.index_cast %57 : i32 to index
    %59 = memref.load %arg1[%58] : memref<16xi32, #tpu.memory_space<smem>>
    %60 = arith.index_cast %59 : i32 to index
    %c0_16 = arith.constant 0 : index
    %61 = vector.load %arg2[%60, %c0_16] : memref<65x8xf32, #tpu.memory_space<vmem>>, vector<1x8xf32>
    %c3_i32_17 = arith.constant 3 : i32
    %62 = arith.addi %46, %c3_i32_17 : i32
    %63 = arith.index_cast %62 : i32 to index
    %64 = memref.load %arg1[%63] : memref<16xi32, #tpu.memory_space<smem>>
    %65 = arith.index_cast %64 : i32 to index
    %c0_18 = arith.constant 0 : index
    %66 = vector.load %arg2[%65, %c0_18] : memref<65x8xf32, #tpu.memory_space<vmem>>, vector<1x8xf32>
    %c4_i32_19 = arith.constant 4 : i32
    %67 = arith.addi %46, %c4_i32_19 : i32
    %68 = arith.index_cast %67 : i32 to index
    %69 = memref.load %arg1[%68] : memref<16xi32, #tpu.memory_space<smem>>
    %70 = arith.index_cast %69 : i32 to index
    %c0_20 = arith.constant 0 : index
    %71 = vector.load %arg2[%70, %c0_20] : memref<65x8xf32, #tpu.memory_space<vmem>>, vector<1x8xf32>
    %c5_i32_21 = arith.constant 5 : i32
    %72 = arith.addi %46, %c5_i32_21 : i32
    %73 = arith.index_cast %72 : i32 to index
    %74 = memref.load %arg1[%73] : memref<16xi32, #tpu.memory_space<smem>>
    %75 = arith.index_cast %74 : i32 to index
    %c0_22 = arith.constant 0 : index
    %76 = vector.load %arg2[%75, %c0_22] : memref<65x8xf32, #tpu.memory_space<vmem>>, vector<1x8xf32>
    %c6_i32_23 = arith.constant 6 : i32
    %77 = arith.addi %46, %c6_i32_23 : i32
    %78 = arith.index_cast %77 : i32 to index
    %79 = memref.load %arg1[%78] : memref<16xi32, #tpu.memory_space<smem>>
    %80 = arith.index_cast %79 : i32 to index
    %c0_24 = arith.constant 0 : index
    %81 = vector.load %arg2[%80, %c0_24] : memref<65x8xf32, #tpu.memory_space<vmem>>, vector<1x8xf32>
    %c7_i32_25 = arith.constant 7 : i32
    %82 = arith.addi %46, %c7_i32_25 : i32
    %83 = arith.index_cast %82 : i32 to index
    %84 = memref.load %arg1[%83] : memref<16xi32, #tpu.memory_space<smem>>
    %85 = arith.index_cast %84 : i32 to index
    %c0_26 = arith.constant 0 : index
    %86 = vector.load %arg2[%85, %c0_26] : memref<65x8xf32, #tpu.memory_space<vmem>>, vector<1x8xf32>
    %87 = tpu.concatenate %51, %56, %61, %66, %71, %76, %81, %86 in 0 : vector<1x8xf32>, vector<1x8xf32>, vector<1x8xf32>, vector<1x8xf32>, vector<1x8xf32>, vector<1x8xf32>, vector<1x8xf32>, vector<1x8xf32> -> vector<8x8xf32>
    %88 = arith.index_cast %46 : i32 to index
    %c0_27 = arith.constant 0 : index
    %89 = vector.load %arg3[%88, %c0_27] : memref<16x8xf32, #tpu.memory_space<vmem>>, vector<8x8xf32>
    tpu.vector_store %arg3[%88, %c0_27], %87 {strides = array<i32>} : memref<16x8xf32, #tpu.memory_space<vmem>>, vector<8x8xf32>,
    %c2_i32_28 = arith.constant 2 : i32
    return
  }
  func.func @transform_0(%arg0: i32, %arg1: memref<16xi32, #tpu.memory_space<smem>>) -> (i32, i32) {
    %c0_i32 = arith.constant 0 : i32
    %c0_i32_0 = arith.constant 0 : i32
    %c0_i32_1 = arith.constant 0 : i32
    return %c0_i32, %c0_i32_0 : i32, i32
  }
  func.func @transform_1(%arg0: i32, %arg1: memref<16xi32, #tpu.memory_space<smem>>) -> (i32, i32) {
    %c0_i32 = arith.constant 0 : i32
    %c0_i32_0 = arith.constant 0 : i32
    %c0_i32_1 = arith.constant 0 : i32
    return %c0_i32, %c0_i32_0 : i32, i32
  }
}

</mosaic_0001>

<llo_original>
// kernel: tpu_custom_call.1
$region0: #{tpu_custom_call.1}
  #allocation0 [shape = 'u32[]', space=smem, size = 0x4, offset = 0x4, fixed_abs, tag = 'smem constant byte address 0x4 - core index']
  #allocation1 [shape = 'u32[144,128]{1,0:T(1,128)}', space=vmem, size = 0x12000, scoped, tag = 'internal scratch']
  #allocation2 [shape = 's32[1]{0}', space=sflag, size = 0x4, scoped, tag = 'scoped memory for tpu_custom_call.1']
  #allocation3 [shape = 'u8[512]{0}', space=smem, size = 0x200, scoped, tag = 'prefetched SMEM operand 0']
  %s0 = inlined_call_operand.vmem [shape: s32[16], index: 0, kind: input, shape index: {}]
  %s1 = inlined_call_operand.vmem [shape: f32[65,8], index: 1, kind: input, shape index: {}]
  %s2 = inlined_call_operand.vmem [shape: f32[16,8], index: 2, kind: output, shape index: {}]
  %s3 = sld [smem:[#allocation0]]
  $region14: #{tpu_custom_call.1} parent=0
    _
  %s5 = ssub.s32 1, %s3
  %s6 = scalar_select 0, %s5, %s3
  %s7 = sshll.u32 %s0, 4
  %s8 = int_to_ptr.vmem [resolvable:$true] %s7
  %10 = dma.vmem_to_smem %s8, 16, [#allocation3], [#allocation2]
  %11 = dma.done [#allocation2], 16
  %12 = sfence
  // Predicated region
  $region2: #{tpu_custom_call.1} parent=0 // pred_check
    _
  $region3: #{tpu_custom_call.1} parent=0 // pred_check_branch
    %14 = sbr.rel (0) target = $region5
  $region4: #{tpu_custom_call.1} parent=0 // pred_region
    _
  $region5: #{tpu_custom_call.1} parent=0 // pred_fallthru
    _
  %s15 = sld [smem:[#allocation3]]
  %s16 = scalar_lea.vmem %s1, %s15
  %v17 = vld [vmem:[%s16] sm:$0x1]
  %s18 = sadd.s32 0, 1
  %s19 = sld [smem:[#allocation3 + %s18]]
  %s20 = scalar_lea.vmem %s1, %s19
  %v21 = vld [vmem:[%s20] sm:$0x1]
  %s22 = sadd.s32 0, 2
  %s23 = sld [smem:[#allocation3 + %s22]]
  %s24 = scalar_lea.vmem %s1, %s23
  %v25 = vld [vmem:[%s24] sm:$0x1]
  %s26 = sadd.s32 0, 3
  %s27 = sld [smem:[#allocation3 + %s26]]
  %s28 = scalar_lea.vmem %s1, %s27
  %v29 = vld [vmem:[%s28] sm:$0x1]
  %s30 = sadd.s32 0, 4
  %s31 = sld [smem:[#allocation3 + %s30]]
  %s32 = scalar_lea.vmem %s1, %s31
  %v33 = vld [vmem:[%s32] sm:$0x1]
  %s34 = sadd.s32 0, 5
  %s35 = sld [smem:[#allocation3 + %s34]]
  %s36 = scalar_lea.vmem %s1, %s35
  %v37 = vld [vmem:[%s36] sm:$0x1]
  %s38 = sadd.s32 0, 6
  %s39 = sld [smem:[#allocation3 + %s38]]
  %s40 = scalar_lea.vmem %s1, %s39
  %v41 = vld [vmem:[%s40] sm:$0x1]
  %s42 = sadd.s32 0, 7
  %s43 = sld [smem:[#allocation3 + %s42]]
  %s44 = scalar_lea.vmem %s1, %s43
  %v45 = vld [vmem:[%s44] sm:$0x1]
  %v47 = vrot.slane %v21, 7
  %v50 = vrot.slane %v25, 6
  %v53 = vrot.slane %v29, 5
  %v56 = vrot.slane %v33, 4
  %v59 = vrot.slane %v37, 3
  %v62 = vrot.slane %v41, 2
  %v65 = vrot.slane %v45, 1
  %vm67 = vcmask 1040384
  %v68 = vsel %vm67, %v17, %v47
  %vm69 = vcmask 1041408
  %v70 = vsel %vm69, %v68, %v50
  %vm71 = vcmask 1042432
  %v72 = vsel %vm71, %v70, %v53
  %vm73 = vcmask 1043456
  %v74 = vsel %vm73, %v72, %v56
  %vm75 = vcmask 1044480
  %v76 = vsel %vm75, %v74, %v59
  %vm77 = vcmask 1045504
  %v78 = vsel %vm77, %v76, %v62
  %vm79 = vcmask 1046528
  %v80 = vsel %vm79, %v78, %v65
  %vm81 = vcmask 64512
  %82 = vst.msk [vmem:[%s2] sm:$0xff] %vm81, %v80
  %s83 = sld [smem:[#allocation3 + $0x8]]
  %s84 = scalar_lea.vmem %s1, %s83
  %v85 = vld [vmem:[%s84] sm:$0x1]
  %s86 = sadd.s32 8, 1
  %s87 = sld [smem:[#allocation3 + %s86]]
  %s88 = scalar_lea.vmem %s1, %s87
  %v89 = vld [vmem:[%s88] sm:$0x1]
  %s90 = sadd.s32 8, 2
  %s91 = sld [smem:[#allocation3 + %s90]]
  %s92 = scalar_lea.vmem %s1, %s91
  %v93 = vld [vmem:[%s92] sm:$0x1]
  %s94 = sadd.s32 8, 3
  %s95 = sld [smem:[#allocation3 + %s94]]
  %s96 = scalar_lea.vmem %s1, %s95
  %v97 = vld [vmem:[%s96] sm:$0x1]
  %s98 = sadd.s32 8, 4
  %s99 = sld [smem:[#allocation3 + %s98]]
  %s100 = scalar_lea.vmem %s1, %s99
  %v101 = vld [vmem:[%s100] sm:$0x1]
  %s102 = sadd.s32 8, 5
  %s103 = sld [smem:[#allocation3 + %s102]]
  %s104 = scalar_lea.vmem %s1, %s103
  %v105 = vld [vmem:[%s104] sm:$0x1]
  %s106 = sadd.s32 8, 6
  %s107 = sld [smem:[#allocation3 + %s106]]
  %s108 = scalar_lea.vmem %s1, %s107
  %v109 = vld [vmem:[%s108] sm:$0x1]
  %s110 = sadd.s32 8, 7
  %s111 = sld [smem:[#allocation3 + %s110]]
  %s112 = scalar_lea.vmem %s1, %s111
  %v113 = vld [vmem:[%s112] sm:$0x1]
  %v115 = vrot.slane %v89, 7
  %v118 = vrot.slane %v93, 6
  %v121 = vrot.slane %v97, 5
  %v124 = vrot.slane %v101, 4
  %v127 = vrot.slane %v105, 3
  %v130 = vrot.slane %v109, 2
  %v133 = vrot.slane %v113, 1
  %v135 = vsel %vm67, %v85, %v115
  %v136 = vsel %vm69, %v135, %v118
  %v137 = vsel %vm71, %v136, %v121
  %v138 = vsel %vm73, %v137, %v124
  %v139 = vsel %vm75, %v138, %v127
  %v140 = vsel %vm77, %v139, %v130
  %v141 = vsel %vm79, %v140, %v133
  %s142 = scalar_lea.vmem %s2, 8
  %143 = vst.msk [vmem:[%s142] sm:$0xff] %vm81, %v141
  // Predicated region
  $region6: #{tpu_custom_call.1} parent=0 // pred_check
    _
  $region7: #{tpu_custom_call.1} parent=0 // pred_check_branch
    %145 = sbr.rel (0) target = $region9
  $region8: #{tpu_custom_call.1} parent=0 // pred_region
    _
  $region9: #{tpu_custom_call.1} parent=0 // pred_fallthru
    _
  // Predicated region
  $region10: #{tpu_custom_call.1} parent=0 // pred_check
    _
  $region11: #{tpu_custom_call.1} parent=0 // pred_check_branch
    %147 = sbr.rel (0) target = $region13
  $region12: #{tpu_custom_call.1} parent=0 // pred_region
    _
  $region13: #{tpu_custom_call.1} parent=0 // pred_fallthru
    _

</llo_original>
